<compile_context>
chip_gen: v6e
topology: v6e:2x2x1
jax: 0.10.0
libtpu: 0.0.40
codegen_flags: <defaults>
</compile_context>

<pallas_src>
import math
from functools import partial

import jax
import jax.numpy as jnp
from jax.experimental import pallas as pl
from jax.experimental.pallas import tpu as pltpu


def _round_up(a: int, b: int) -> int:
    return -(-a // b) * b


_SQRT_2_OVER_PI = math.sqrt(2.0 / math.pi)
_INV_SQRT_2 = 1.0 / math.sqrt(2.0)


def _gelu_tanh(x):
    # tanh-approx GELU: the tanh goes to the EUP (its own bundle slot), so the
    # epilogue costs only a handful of VALU ops per element.
    return 0.5 * x * (1.0 + jnp.tanh(_SQRT_2_OVER_PI * (x + 0.044715 * (x * x * x))))


def _gelu_erf(x):
    # erf-GELU via Abramowitz & Stegun 7.1.26 polynomial (|erf err| < 1.5e-7),
    # exact division (no approx reciprocal) so accuracy is limited by bf16 inputs.
    z = x * _INV_SQRT_2
    s = jnp.where(z >= 0.0, 1.0, -1.0)
    az = jnp.abs(z)
    t = 1.0 / (1.0 + 0.3275911 * az)
    poly = ((((1.061405429 * t - 1.453152027) * t + 1.421413741) * t
             - 0.284496736) * t + 0.254829592) * t
    erf = s * (1.0 - poly * jnp.exp(-az * az))
    return 0.5 * x * (1.0 + erf)


# ----------------------------------------------------------------------------
# Kernels: out = (x @ Wa + ba) * GELU(x @ Wg + bg)
# ----------------------------------------------------------------------------
def _geglu_kernel_fullk(x_ref, w_ref, b_ref, o_ref, *, gelu_fn):
    """grid = (M tiles, N tiles); the whole K contraction runs in one step."""
    x = x_ref[...]
    if x.dtype != jnp.bfloat16:
        x = x.astype(jnp.bfloat16)        # fused cast: no wrapper-side HBM pass
    a = jnp.dot(x, w_ref[0], preferred_element_type=jnp.float32) + b_ref[0]
    g = jnp.dot(x, w_ref[1], preferred_element_type=jnp.float32) + b_ref[1]
    o_ref[...] = (a * gelu_fn(g)).astype(o_ref.dtype)


def _geglu_kernel_ksplit(x_ref, w_ref, b_ref, o_ref, acc_ref, *, gelu_fn):
    """grid = (M tiles, N tiles, K tiles); f32 accumulators resident across K."""
    k = pl.program_id(2)

    @pl.when(k == 0)
    def _():
        # Seed the accumulators with the bias: saves epilogue adds and a zero fill.
        acc_ref[0] = jnp.broadcast_to(b_ref[0], acc_ref.shape[1:])
        acc_ref[1] = jnp.broadcast_to(b_ref[1], acc_ref.shape[1:])

    x = x_ref[...]
    if x.dtype != jnp.bfloat16:
        x = x.astype(jnp.bfloat16)
    acc_ref[0] += jnp.dot(x, w_ref[0], preferred_element_type=jnp.float32)
    acc_ref[1] += jnp.dot(x, w_ref[1], preferred_element_type=jnp.float32)

    @pl.when(k == pl.num_programs(2) - 1)
    def _():
        o_ref[...] = (acc_ref[0] * gelu_fn(acc_ref[1])).astype(o_ref.dtype)


# ----------------------------------------------------------------------------
# Wrapper: pack parameters once, return a jittable x -> GEGLU(x) closure.
# ----------------------------------------------------------------------------
def make_geglu(w, b, *, approximate_gelu=True, out_dtype=None,
               tm_max=512, tn_max=512, tk_max=2048):
    """w: [Din, 2*Dout] (cols [:Dout]=value proj, [Dout:]=gate proj);  b: [2*Dout]."""
    Din, two_dout = w.shape
    Dout = two_dout // 2
    assert two_dout == 2 * Dout and b.shape == (two_dout,)

    # ---- static tile choices (independent of the token count M) -------------
    Np = _round_up(Dout, 128)
    tn = next((c for c in (tn_max, 256, 128) if Np % c == 0), 128)
    Kp0 = _round_up(Din, 128)
    if Kp0 <= tk_max:
        Kp = tk = Kp0            # collapse the K grid axis entirely
    else:
        tk = 512
        Kp = _round_up(Din, tk)
    nk = Kp // tk

    # ---- pack parameters once (value/gate halves stacked, padded, bf16) -----
    wa = w[:, :Dout].astype(jnp.bfloat16)
    wg = w[:, Dout:].astype(jnp.bfloat16)
    w_packed = jnp.stack([wa, wg])                               # (2, Din, Dout)
    if (Kp, Np) != (Din, Dout):
        w_packed = jnp.pad(w_packed, ((0, 0), (0, Kp - Din), (0, Np - Dout)))
    b_packed = jnp.stack([b[:Dout], b[Dout:]]).astype(jnp.float32)[:, None, :]
    if Np != Dout:
        b_packed = jnp.pad(b_packed, ((0, 0), (0, 0), (0, Np - Dout)))
    w_packed = jax.device_put(w_packed)
    b_packed = jax.device_put(b_packed)

    gelu_fn = _gelu_tanh if approximate_gelu else _gelu_erf

    def apply(x):
        if x.shape[-1] != Din:
            raise ValueError(f"expected trailing dim {Din}, got {x.shape}")
        lead = x.shape[:-1]
        M = 1
        for d in lead:
            M *= int(d)
        odt = jnp.dtype(out_dtype) if out_dtype is not None else x.dtype

        # Token tile: biggest that fits; 256-multiples preferred for v6e/v7x MXU.
        if M <= tm_max:
            tm = _round_up(M, 16)
        else:
            tm = tm_max if (_round_up(M, tm_max) - M) * 8 <= M else 256
        Mp = _round_up(M, tm)

        x2 = x.reshape(M, Din)
        if (Mp, Kp) != (M, Din):
            x2 = jnp.pad(x2, ((0, Mp - M), (0, Kp - Din)))

        gm, gn = Mp // tm, Np // tn

        # VMEM budget (double-buffered ins/outs + accumulators) -> scoped limit.
        xbytes = jnp.dtype(x2.dtype).itemsize
        vmem_est = (2 * tm * tk * xbytes                         # x tiles
                    + 2 * 2 * tk * tn * 2                        # packed weights (bf16)
                    + 2 * 2 * tn * 4                             # packed biases
                    + 2 * tm * tn * jnp.dtype(odt).itemsize      # output tiles
                    + (2 * tm * tn * 4 if nk > 1 else 0))        # accumulators
        vmem_limit = max(32 << 20, min(int(vmem_est * 2) + (4 << 20), 64 << 20))

        cost = pl.CostEstimate(
            flops=4 * M * Dout * Din,
            transcendentals=M * Dout,
            bytes_accessed=(M * Din * xbytes + 2 * Din * Dout * 2
                            + M * Dout * jnp.dtype(odt).itemsize),
        )

        if nk == 1:
            kernel = partial(_geglu_kernel_fullk, gelu_fn=gelu_fn)
            grid = (gm, gn)
            in_specs = [
                pl.BlockSpec((tm, tk), lambda i, j: (i, 0)),           # x tile
                pl.BlockSpec((2, tk, tn), lambda i, j: (0, 0, j)),     # packed weights
                pl.BlockSpec((2, 1, tn), lambda i, j: (0, 0, j)),      # packed biases
            ]
            out_spec = pl.BlockSpec((tm, tn), lambda i, j: (i, j))
            scratch = []
            dims = ("parallel", "parallel")
        else:
            kernel = partial(_geglu_kernel_ksplit, gelu_fn=gelu_fn)
            grid = (gm, gn, nk)
            in_specs = [
                pl.BlockSpec((tm, tk), lambda i, j, k: (i, k)),
                pl.BlockSpec((2, tk, tn), lambda i, j, k: (0, k, j)),
                pl.BlockSpec((2, 1, tn), lambda i, j, k: (0, 0, j)),
            ]
            out_spec = pl.BlockSpec((tm, tn), lambda i, j, k: (i, j))
            scratch = [pltpu.VMEM((2, tm, tn), jnp.float32)]
            dims = ("parallel", "parallel", "arbitrary")

        out = pl.pallas_call(
            kernel,
            out_shape=jax.ShapeDtypeStruct((Mp, Np), odt),
            grid_spec=pltpu.PrefetchScalarGridSpec(
                num_scalar_prefetch=0,
                grid=grid,
                in_specs=in_specs,
                out_specs=out_spec,
                scratch_shapes=scratch,
            ),
            compiler_params=pltpu.CompilerParams(
                dimension_semantics=dims,
                vmem_limit_bytes=vmem_limit,
            ),
            cost_estimate=cost,
        )(x2, w_packed, b_packed)

        if (Mp, Np) != (M, Dout):
            out = out[:M, :Dout]
        return out.reshape(*lead, Dout)

    return apply


# ----------------------------------------------------------------------------
if __name__ == "__main__":
    # Small shapes consistent with the module, lane-dense (multiples of 128 tokens/feat).
    B, N = 2, 64                            # 128 tokens total
    in_features, out_features = 128, 128

    key = jax.random.PRNGKey(0)
    kx, kw, kb = jax.random.split(key, 3)
    bound = 1.0 / math.sqrt(in_features)    # PyTorch nn.Linear default init range
    x = jax.random.normal(kx, (B, N, in_features), jnp.float32)
    w = jax.random.uniform(kw, (in_features, 2 * out_features), jnp.float32, -bound, bound)
    b = jax.random.uniform(kb, (2 * out_features,), jnp.float32, -bound, bound)

    # Pure-JAX f32 references.
    h = x @ w + b
    a_ref, g_ref = h[..., :out_features], h[..., out_features:]
    ref_tanh = a_ref * jax.nn.gelu(g_ref, approximate=True)
    ref_erf = a_ref * jax.nn.gelu(g_ref, approximate=False)   # torch.nn.GELU() default

    # Fast path (tanh-approx GELU; recommended epilogue on v6e/v7x).
    fwd = jax.jit(make_geglu(w, b))
    out = jax.block_until_ready(fwd(x))
    assert out.shape == (B, N, out_features)
    if not jnp.allclose(out, ref_tanh, atol=3e-2, rtol=3e-2):
        err = float(jnp.max(jnp.abs(out - ref_tanh)))
        raise AssertionError(f"tanh-GELU GEGLU mismatch vs JAX reference (max abs err {err})")

    # Exact-GELU path (matches torch.nn.GELU()'s erf semantics).
    fwd_exact = jax.jit(make_geglu(w, b, approximate_gelu=False))
    out_e = jax.block_until_ready(fwd_exact(x))
    assert out_e.shape == (B, N, out_features)
    if not jnp.allclose(out_e, ref_erf, atol=3e-2, rtol=3e-2):
        err = float(jnp.max(jnp.abs(out_e - ref_erf)))
        raise AssertionError(f"erf-GELU GEGLU mismatch vs JAX reference (max abs err {err})")

    print("KERNEL_OK")
</pallas_src>

<mosaic_0001>
module attributes {stable_mosaic.version = 11 : i64} {
  func.func @_geglu_kernel_fullk(%arg0: i32, %arg1: i32, %arg2: memref<128x128xf32, #tpu.memory_space<vmem>>, %arg3: memref<2x128x128xbf16, #tpu.memory_space<vmem>>, %arg4: memref<2x1x128xf32, #tpu.memory_space<vmem>>, %arg5: memref<128x128xf32, #tpu.memory_space<vmem>>) attributes {dimension_semantics = [#tpu.dimension_semantics<parallel>, #tpu.dimension_semantics<parallel>], iteration_bounds = array<i64: 1, 1>, scalar_prefetch = 0 : i64, scratch_operands = 0 : i64, tpu.core_type = #tpu.core_type<tc>, window_params = [{transform_indices = @transform_0, window_bounds = array<i64: 128, 128>}, {transform_indices = @transform_1, window_bounds = array<i64: 2, 128, 128>}, {transform_indices = @transform_2, window_bounds = array<i64: 2, 1, 128>}, {transform_indices = @transform_3, window_bounds = array<i64: 128, 128>}]} {
    %c0 = arith.constant 0 : index
    %c0_0 = arith.constant 0 : index
    %0 = vector.load %arg2[%c0, %c0_0] : memref<128x128xf32, #tpu.memory_space<vmem>>, vector<128x128xf32>
    %1 = arith.truncf %0 : vector<128x128xf32> to vector<128x128xbf16>
    %c0_1 = arith.constant 0 : index
    %c0_2 = arith.constant 0 : index
    %c0_3 = arith.constant 0 : index
    %2 = vector.load %arg3[%c0_1, %c0_2, %c0_3] : memref<2x128x128xbf16, #tpu.memory_space<vmem>>, vector<1x128x128xbf16>
    %3 = vector.shape_cast %2 : vector<1x128x128xbf16> to vector<128x128xbf16>
    %cst = arith.constant dense<0.000000e+00> : vector<128x128xf32>
    %4 = tpu.matmul %1, %3, %cst {dimension_numbers = #tpu.dot_dimension_numbers<[1], [0], [0], [1], [0, 0, 1, 1], [], []>} : vector<128x128xbf16>, vector<128x128xbf16>, vector<128x128xf32> -> vector<128x128xf32>
    %c0_4 = arith.constant 0 : index
    %c0_5 = arith.constant 0 : index
    %c0_6 = arith.constant 0 : index
    %5 = vector.load %arg4[%c0_4, %c0_5, %c0_6] : memref<2x1x128xf32, #tpu.memory_space<vmem>>, vector<1x1x128xf32>
    %6 = vector.shape_cast %5 : vector<1x1x128xf32> to vector<1x128xf32>
    %7 = vector.broadcast %6 : vector<1x128xf32> to vector<128x128xf32>
    %8 = arith.addf %4, %7 : vector<128x128xf32>
    %c1 = arith.constant 1 : index
    %c0_7 = arith.constant 0 : index
    %c0_8 = arith.constant 0 : index
    %9 = vector.load %arg3[%c1, %c0_7, %c0_8] : memref<2x128x128xbf16, #tpu.memory_space<vmem>>, vector<1x128x128xbf16>
    %10 = vector.shape_cast %9 : vector<1x128x128xbf16> to vector<128x128xbf16>
    %cst_9 = arith.constant dense<0.000000e+00> : vector<128x128xf32>
    %11 = tpu.matmul %1, %10, %cst_9 {dimension_numbers = #tpu.dot_dimension_numbers<[1], [0], [0], [1], [0, 0, 1, 1], [], []>} : vector<128x128xbf16>, vector<128x128xbf16>, vector<128x128xf32> -> vector<128x128xf32>
    %c1_10 = arith.constant 1 : index
    %c0_11 = arith.constant 0 : index
    %c0_12 = arith.constant 0 : index
    %12 = vector.load %arg4[%c1_10, %c0_11, %c0_12] : memref<2x1x128xf32, #tpu.memory_space<vmem>>, vector<1x1x128xf32>
    %13 = vector.shape_cast %12 : vector<1x1x128xf32> to vector<1x128xf32>
    %14 = vector.broadcast %13 : vector<1x128xf32> to vector<128x128xf32>
    %15 = arith.addf %11, %14 : vector<128x128xf32>
    %cst_13 = arith.constant 5.000000e-01 : f32
    %16 = vector.broadcast %cst_13 : f32 to vector<128x128xf32>
    %17 = arith.mulf %16, %15 : vector<128x128xf32>
    %18 = arith.mulf %15, %15 : vector<128x128xf32>
    %19 = arith.mulf %18, %15 : vector<128x128xf32>
    %cst_14 = arith.constant 4.471500e-02 : f32
    %20 = vector.broadcast %cst_14 : f32 to vector<128x128xf32>
    %21 = arith.mulf %20, %19 : vector<128x128xf32>
    %22 = arith.addf %15, %21 : vector<128x128xf32>
    %cst_15 = arith.constant 0.797884583 : f32
    %23 = vector.broadcast %cst_15 : f32 to vector<128x128xf32>
    %24 = arith.mulf %23, %22 : vector<128x128xf32>
    %25 = math.tanh %24 : vector<128x128xf32>
    %cst_16 = arith.constant 1.000000e+00 : f32
    %26 = vector.broadcast %cst_16 : f32 to vector<128x128xf32>
    %27 = arith.addf %26, %25 : vector<128x128xf32>
    %28 = arith.mulf %17, %27 : vector<128x128xf32>
    %29 = arith.mulf %8, %28 : vector<128x128xf32>
    %c0_17 = arith.constant 0 : index
    %c0_18 = arith.constant 0 : index
    %30 = vector.load %arg5[%c0_17, %c0_18] : memref<128x128xf32, #tpu.memory_space<vmem>>, vector<128x128xf32>
    tpu.vector_store %arg5[%c0_17, %c0_18], %29 {strides = array<i32>} : memref<128x128xf32, #tpu.memory_space<vmem>>, vector<128x128xf32>,
    return
  }
  func.func @transform_0(%arg0: i32, %arg1: i32) -> (i32, i32) {
    %c0_i32 = arith.constant 0 : i32
    %c0_i32_0 = arith.constant 0 : i32
    return %arg0, %c0_i32 : i32, i32
  }
  func.func @transform_1(%arg0: i32, %arg1: i32) -> (i32, i32, i32) {
    %c0_i32 = arith.constant 0 : i32
    %c0_i32_0 = arith.constant 0 : i32
    %c0_i32_1 = arith.constant 0 : i32
    return %c0_i32, %c0_i32_0, %arg1 : i32, i32, i32
  }
  func.func @transform_2(%arg0: i32, %arg1: i32) -> (i32, i32, i32) {
    %c0_i32 = arith.constant 0 : i32
    %c0_i32_0 = arith.constant 0 : i32
    %c0_i32_1 = arith.constant 0 : i32
    return %c0_i32, %c0_i32_0, %arg1 : i32, i32, i32
  }
  func.func @transform_3(%arg0: i32, %arg1: i32) -> (i32, i32) {
    %c0_i32 = arith.constant 0 : i32
    return %arg0, %arg1 : i32, i32
  }
}

</mosaic_0001>

<llo_original>
// kernel: apply.1
$region0: #{apply.1}
  #allocation0 [shape = 'u32[]', space=smem, size = 0x4, offset = 0x4, fixed_abs, tag = 'smem constant byte address 0x4 - core index']
  #allocation1 [shape = 'u32[144,128]{1,0:T(1,128)}', space=vmem, size = 0x12000, scoped, tag = 'internal scratch']
  %s0 = inlined_call_operand.hbm [shape: f32[128,128], index: 0, kind: input, shape index: {}]
  %s1 = inlined_call_operand.hbm [shape: bf16[2,128,128], index: 1, kind: input, shape index: {}]
  %s2 = inlined_call_operand.vmem [shape: f32[2,1,128], index: 2, kind: input, shape index: {}]
  %s3 = inlined_call_operand.hbm [shape: f32[128,128], index: 3, kind: output, shape index: {}]
  %s4 = sld [smem:[#allocation0]]
  $region30: #{apply.1} parent=0
    _
  %s6 = ssub.s32 1, %s4
  %s7 = scalar_select 0, %s6, %s4
  $region1: #{apply.1} parent=0
    #allocation2 [shape = 'u8[65536]{0}', space=vmem, size = 0x10000, scoped, tag = 'input window, operand 0, single buffered']
    #allocation3 [shape = 's32[1]{0}', space=sflag, size = 0x4, scoped, tag = 'scoped memory for apply.1']
    #allocation4 [shape = 's32[1]{0}', space=sflag, size = 0x4, scoped, tag = 'scoped memory for apply.1']
    #allocation5 [shape = 'u8[65536]{0}', space=vmem, size = 0x10000, scoped, tag = 'input window, operand 1, single buffered']
    #allocation6 [shape = 's32[1]{0}', space=sflag, size = 0x4, scoped, tag = 'scoped memory for apply.1']
    #allocation7 [shape = 'u8[65536]{0}', space=vmem, size = 0x10000, scoped, tag = 'output window, operand 0, single buffered']
    %8 = vsyncpa [#allocation3], 0
    %9 = vsyncpa [#allocation6], 0
    %10 = vsyncpa [#allocation4], 0
    // Predicated region
    $region2: #{apply.1} parent=1 // pred_check
      _
    $region3: #{apply.1} parent=1 // pred_check_branch
      %12 = sbr.rel (0) target = $region5
    $region4: #{apply.1} parent=1 // pred_region
      %s14 = ssub.s32 2048, 2048
      %15 = vsyncadd [#allocation3], %s14
      %s16 = sshll.u32 [#allocation2], 4
      %s17 = int_to_ptr.vmem [resolvable:$true] %s16
      %22 = dma.hbm_to_vmem [thread:$0]  %s0, 2048, %s17, [#allocation3], 128, 128, 8
    $region5: #{apply.1} parent=1 // pred_fallthru
      _
    // Predicated region
    $region6: #{apply.1} parent=1 // pred_check
      _
    $region7: #{apply.1} parent=1 // pred_check_branch
      %24 = sbr.rel (0) target = $region9
    $region8: #{apply.1} parent=1 // pred_region
      %s26 = ssub.s32 2048, 2048
      %27 = vsyncadd [#allocation6], %s26
      %s28 = sshll.u32 [#allocation5], 4
      %s29 = int_to_ptr.vmem [resolvable:$true] %s28
      %34 = dma.hbm_to_vmem [thread:$0]  %s1, 2048, %s29, [#allocation6], 64, 64, 4
    $region9: #{apply.1} parent=1 // pred_fallthru
      _
    // Predicated region
    $region10: #{apply.1} parent=1 // pred_check
      _
    $region11: #{apply.1} parent=1 // pred_check_branch
      %36 = sbr.rel (0) target = $region13
    $region12: #{apply.1} parent=1 // pred_region
      _
    $region13: #{apply.1} parent=1 // pred_fallthru
      _
    // Predicated region
    $region14: #{apply.1} parent=1 // pred_check
      _
    $region15: #{apply.1} parent=1 // pred_check_branch
      %38 = sbr.rel (0) target = $region17
    $region16: #{apply.1} parent=1 // pred_region
      %39 = dma.done [#allocation3], 2048
    $region17: #{apply.1} parent=1 // pred_fallthru
      _
    // Predicated region
    $region18: #{apply.1} parent=1 // pred_check
      _
    $region19: #{apply.1} parent=1 // pred_check_branch
      %41 = sbr.rel (0) target = $region21
    $region20: #{apply.1} parent=1 // pred_region
      %42 = dma.done [#allocation6], 2048
    $region21: #{apply.1} parent=1 // pred_fallthru
      _
    %v44 = vld [vmem:[#allocation2] sm:$0xff]
    %v45 = vld [vmem:[#allocation2 + $0x8] sm:$0xff]
    %v46 = vld [vmem:[#allocation2 + $0x10] sm:$0xff]
    %v47 = vld [vmem:[#allocation2 + $0x18] sm:$0xff]
    %v48 = vld [vmem:[#allocation2 + $0x20] sm:$0xff]
    %v49 = vld [vmem:[#allocation2 + $0x28] sm:$0xff]
    %v50 = vld [vmem:[#allocation2 + $0x30] sm:$0xff]
    %v51 = vld [vmem:[#allocation2 + $0x38] sm:$0xff]
    %v52 = vld [vmem:[#allocation2 + $0x40] sm:$0xff]
    %v53 = vld [vmem:[#allocation2 + $0x48] sm:$0xff]
    %v54 = vld [vmem:[#allocation2 + $0x50] sm:$0xff]
    %v55 = vld [vmem:[#allocation2 + $0x58] sm:$0xff]
    %v56 = vld [vmem:[#allocation2 + $0x60] sm:$0xff]
    %v57 = vld [vmem:[#allocation2 + $0x68] sm:$0xff]
    %v58 = vld [vmem:[#allocation2 + $0x70] sm:$0xff]
    %v59 = vld [vmem:[#allocation2 + $0x78] sm:$0xff]
    %v60 = vpack.c.bf16 %v45, %v44
    %v61 = vpack.c.bf16 %v47, %v46
    %v62 = vpack.c.bf16 %v49, %v48
    %v63 = vpack.c.bf16 %v51, %v50
    %v64 = vpack.c.bf16 %v53, %v52
    %v65 = vpack.c.bf16 %v55, %v54
    %v66 = vpack.c.bf16 %v57, %v56
    %v67 = vpack.c.bf16 %v59, %v58
    %v68 = vld [vmem:[#allocation5] sm:$0xf]
    %v69 = vld [vmem:[#allocation5 + $0x4] sm:$0xf]
    %v70 = vld [vmem:[#allocation5 + $0x8] sm:$0xf]
    %v71 = vld [vmem:[#allocation5 + $0xc] sm:$0xf]
    %v72 = vld [vmem:[#allocation5 + $0x10] sm:$0xf]
    %v73 = vld [vmem:[#allocation5 + $0x14] sm:$0xf]
    %v74 = vld [vmem:[#allocation5 + $0x18] sm:$0xf]
    %v75 = vld [vmem:[#allocation5 + $0x1c] sm:$0xf]
    %v76 = vld [vmem:[#allocation5 + $0x20] sm:$0xf]
    %v77 = vld [vmem:[#allocation5 + $0x24] sm:$0xf]
    %v78 = vld [vmem:[#allocation5 + $0x28] sm:$0xf]
    %v79 = vld [vmem:[#allocation5 + $0x2c] sm:$0xf]
    %v80 = vld [vmem:[#allocation5 + $0x30] sm:$0xf]
    %v81 = vld [vmem:[#allocation5 + $0x34] sm:$0xf]
    %v82 = vld [vmem:[#allocation5 + $0x38] sm:$0xf]
    %v83 = vld [vmem:[#allocation5 + $0x3c] sm:$0xf]
    %v84 = vld [vmem:[%s2] sm:$0x1]
    %v86 = vlaneseq
    %v87 = vshrl.u32 %v86, 7
    %v88 = vsub.s32 0, %v87
    %v89 = vrot.slane %v84, %v88
    %v107 = vunpack.c.l.b16 %v68
    %v108 = vunpack.c.l.b16 %v69
    %v109 = vunpack.c.l.b16 %v70
    %v110 = vunpack.c.l.b16 %v71
    %v111 = vunpack.c.l.b16 %v72
    %v112 = vunpack.c.l.b16 %v73
    %v113 = vunpack.c.l.b16 %v74
    %v114 = vunpack.c.l.b16 %v75
    %v115 = vunpack.c.l.b16 %v76
    %v116 = vunpack.c.l.b16 %v77
    %v117 = vunpack.c.l.b16 %v78
    %v118 = vunpack.c.l.b16 %v79
    %v119 = vunpack.c.l.b16 %v80
    %v120 = vunpack.c.l.b16 %v81
    %v121 = vunpack.c.l.b16 %v82
    %v122 = vunpack.c.l.b16 %v83
    %v123 = vpack.c.b16 %v108, %v107
    %v124 = vpack.c.b16 %v110, %v109
    %v125 = vpack.c.b16 %v112, %v111
    %v126 = vpack.c.b16 %v114, %v113
    %v127 = vpack.c.b16 %v116, %v115
    %v128 = vpack.c.b16 %v118, %v117
    %v129 = vpack.c.b16 %v120, %v119
    %v130 = vpack.c.b16 %v122, %v121
    %139 = vmatprep.subr.bf16.mxu0 0
    %140 = vmatpush1.bf16.msra.mxu0 %v130
    %141 = vmatprep.subr.bf16.mxu0 0
    %142 = vmatpush1.bf16.msra.mxu0 %v129
    %143 = vmatprep.subr.bf16.mxu0 0
    %144 = vmatpush1.bf16.msra.mxu0 %v128
    %145 = vmatprep.subr.bf16.mxu0 0
    %146 = vmatpush1.bf16.msra.mxu0 %v127
    %147 = vmatprep.subr.bf16.mxu0 0
    %148 = vmatpush1.bf16.msra.mxu0 %v126
    %149 = vmatprep.subr.bf16.mxu0 0
    %150 = vmatpush1.bf16.msra.mxu0 %v125
    %151 = vmatprep.subr.bf16.mxu0 0
    %152 = vmatpush1.bf16.msra.mxu0 %v124
    %153 = vmatprep.subr.bf16.mxu0 0
    %154 = vmatpush1.bf16.msra.mxu0 %v123
    %155 = vmatprep.subr.bf16.mxu0 0
    %156 = vmatpush2.bf16.msra.mxu0 0
    %157 = vmatprep.subr.bf16.mxu0 0
    %158 = vmatpush2.bf16.msra.mxu0 0
    %159 = vmatprep.subr.bf16.mxu0 0
    %160 = vmatpush2.bf16.msra.mxu0 0
    %161 = vmatprep.subr.bf16.mxu0 0
    %162 = vmatpush2.bf16.msra.mxu0 0
    %163 = vmatprep.subr.bf16.mxu0 0
    %164 = vmatpush2.bf16.msra.mxu0 0
    %165 = vmatprep.subr.bf16.mxu0 0
    %166 = vmatpush2.bf16.msra.mxu0 0
    %167 = vmatprep.subr.bf16.mxu0 0
    %168 = vmatpush2.bf16.msra.mxu0 0
    %169 = vmatprep.subr.bf16.mxu0 0
    %170 = vmatpush2.bf16.msra.mxu0 0
    %171 = vmatprep.mubr.bf16.mxu0 0
    %172 = vmatmul.mubr.bf16.gmra.mxu0 %v60
    %v173 = vpop.f32.mrf.mxu0
    %v174 = vadd.f32 %v89, %v173
    %v175 = vpop.f32.mrf.mxu0
    %v176 = vpop.f32.mrf.mxu0
    %v177 = vadd.f32 %v89, %v176
    %v178 = vpop.f32.mrf.mxu0
    %179 = vmatprep.mubr.bf16.mxu0 0
    %180 = vmatmul.mubr.bf16.gmra.mxu0 %v61
    %v181 = vpop.f32.mrf.mxu0
    %v182 = vadd.f32 %v89, %v181
    %v183 = vpop.f32.mrf.mxu0
    %v184 = vpop.f32.mrf.mxu0
    %v185 = vadd.f32 %v89, %v184
    %v186 = vpop.f32.mrf.mxu0
    %187 = vmatprep.mubr.bf16.mxu0 0
    %188 = vmatmul.mubr.bf16.gmra.mxu0 %v62
    %v189 = vpop.f32.mrf.mxu0
    %v190 = vadd.f32 %v89, %v189
    %v191 = vpop.f32.mrf.mxu0
    %v192 = vpop.f32.mrf.mxu0
    %v193 = vadd.f32 %v89, %v192
    %v194 = vpop.f32.mrf.mxu0
    %195 = vmatprep.mubr.bf16.mxu0 0
    %196 = vmatmul.mubr.bf16.gmra.mxu0 %v63
    %v197 = vpop.f32.mrf.mxu0
    %v198 = vadd.f32 %v89, %v197
    %v199 = vpop.f32.mrf.mxu0
    %v200 = vpop.f32.mrf.mxu0
    %v201 = vadd.f32 %v89, %v200
    %v202 = vpop.f32.mrf.mxu0
    %203 = vmatprep.mubr.bf16.mxu0 0
    %204 = vmatmul.mubr.bf16.gmra.mxu0 %v64
    %v205 = vpop.f32.mrf.mxu0
    %v206 = vadd.f32 %v89, %v205
    %v207 = vpop.f32.mrf.mxu0
    %v208 = vpop.f32.mrf.mxu0
    %v209 = vadd.f32 %v89, %v208
    %v210 = vpop.f32.mrf.mxu0
    %211 = vmatprep.mubr.bf16.mxu0 0
    %212 = vmatmul.mubr.bf16.gmra.mxu0 %v65
    %v213 = vpop.f32.mrf.mxu0
    %v214 = vadd.f32 %v89, %v213
    %v215 = vpop.f32.mrf.mxu0
    %v216 = vpop.f32.mrf.mxu0
    %v217 = vadd.f32 %v89, %v216
    %v218 = vpop.f32.mrf.mxu0
    %219 = vmatprep.mubr.bf16.mxu0 0
    %220 = vmatmul.mubr.bf16.gmra.mxu0 %v66
    %v221 = vpop.f32.mrf.mxu0
    %v222 = vadd.f32 %v89, %v221
    %v223 = vpop.f32.mrf.mxu0
    %v224 = vpop.f32.mrf.mxu0
    %v225 = vadd.f32 %v89, %v224
    %v226 = vpop.f32.mrf.mxu0
    %227 = vmatprep.mubr.bf16.mxu0 0
    %228 = vmatmul.mubr.bf16.gmra.mxu0 %v67
    %v229 = vpop.f32.mrf.mxu0
    %v230 = vadd.f32 %v89, %v229
    %v231 = vpop.f32.mrf.mxu0
    %v232 = vpop.f32.mrf.mxu0
    %v233 = vadd.f32 %v89, %v232
    %v234 = vpop.f32.mrf.mxu0
    %235 = vdwg.mxu0
    %s236 = scalar_lea.vmem [#allocation5], 64
    %v237 = vld [vmem:[%s236] sm:$0xf]
    %v238 = vld [vmem:[%s236 + $0x4] sm:$0xf]
    %v239 = vld [vmem:[%s236 + $0x8] sm:$0xf]
    %v240 = vld [vmem:[%s236 + $0xc] sm:$0xf]
    %v241 = vld [vmem:[%s236 + $0x10] sm:$0xf]
    %v242 = vld [vmem:[%s236 + $0x14] sm:$0xf]
    %v243 = vld [vmem:[%s236 + $0x18] sm:$0xf]
    %v244 = vld [vmem:[%s236 + $0x1c] sm:$0xf]
    %v245 = vld [vmem:[%s236 + $0x20] sm:$0xf]
    %v246 = vld [vmem:[%s236 + $0x24] sm:$0xf]
    %v247 = vld [vmem:[%s236 + $0x28] sm:$0xf]
    %v248 = vld [vmem:[%s236 + $0x2c] sm:$0xf]
    %v249 = vld [vmem:[%s236 + $0x30] sm:$0xf]
    %v250 = vld [vmem:[%s236 + $0x34] sm:$0xf]
    %v251 = vld [vmem:[%s236 + $0x38] sm:$0xf]
    %v252 = vld [vmem:[%s236 + $0x3c] sm:$0xf]
    %s253 = scalar_lea.vmem %s2, 1
    %v254 = vld [vmem:[%s253] sm:$0x1]
    %v256 = vlaneseq
    %v257 = vshrl.u32 %v256, 7
    %v258 = vsub.s32 0, %v257
    %v259 = vrot.slane %v254, %v258
    %v277 = vunpack.c.l.b16 %v237
    %v278 = vunpack.c.l.b16 %v238
    %v279 = vunpack.c.l.b16 %v239
    %v280 = vunpack.c.l.b16 %v240
    %v281 = vunpack.c.l.b16 %v241
    %v282 = vunpack.c.l.b16 %v242
    %v283 = vunpack.c.l.b16 %v243
    %v284 = vunpack.c.l.b16 %v244
    %v285 = vunpack.c.l.b16 %v245
    %v286 = vunpack.c.l.b16 %v246
    %v287 = vunpack.c.l.b16 %v247
    %v288 = vunpack.c.l.b16 %v248
    %v289 = vunpack.c.l.b16 %v249
    %v290 = vunpack.c.l.b16 %v250
    %v291 = vunpack.c.l.b16 %v251
    %v292 = vunpack.c.l.b16 %v252
    %v293 = vpack.c.b16 %v278, %v277
    %v294 = vpack.c.b16 %v280, %v279
    %v295 = vpack.c.b16 %v282, %v281
    %v296 = vpack.c.b16 %v284, %v283
    %v297 = vpack.c.b16 %v286, %v285
    %v298 = vpack.c.b16 %v288, %v287
    %v299 = vpack.c.b16 %v290, %v289
    %v300 = vpack.c.b16 %v292, %v291
    %309 = vmatprep.subr.bf16.mxu0 0
    %310 = vmatpush1.bf16.msra.mxu0 %v300
    %311 = vmatprep.subr.bf16.mxu0 0
    %312 = vmatpush1.bf16.msra.mxu0 %v299
    %313 = vmatprep.subr.bf16.mxu0 0
    %314 = vmatpush1.bf16.msra.mxu0 %v298
    %315 = vmatprep.subr.bf16.mxu0 0
    %316 = vmatpush1.bf16.msra.mxu0 %v297
    %317 = vmatprep.subr.bf16.mxu0 0
    %318 = vmatpush1.bf16.msra.mxu0 %v296
    %319 = vmatprep.subr.bf16.mxu0 0
    %320 = vmatpush1.bf16.msra.mxu0 %v295
    %321 = vmatprep.subr.bf16.mxu0 0
    %322 = vmatpush1.bf16.msra.mxu0 %v294
    %323 = vmatprep.subr.bf16.mxu0 0
    %324 = vmatpush1.bf16.msra.mxu0 %v293
    %325 = vmatprep.subr.bf16.mxu0 0
    %326 = vmatpush2.bf16.msra.mxu0 0
    %327 = vmatprep.subr.bf16.mxu0 0
    %328 = vmatpush2.bf16.msra.mxu0 0
    %329 = vmatprep.subr.bf16.mxu0 0
    %330 = vmatpush2.bf16.msra.mxu0 0
    %331 = vmatprep.subr.bf16.mxu0 0
    %332 = vmatpush2.bf16.msra.mxu0 0
    %333 = vmatprep.subr.bf16.mxu0 0
    %334 = vmatpush2.bf16.msra.mxu0 0
    %335 = vmatprep.subr.bf16.mxu0 0
    %336 = vmatpush2.bf16.msra.mxu0 0
    %337 = vmatprep.subr.bf16.mxu0 0
    %338 = vmatpush2.bf16.msra.mxu0 0
    %339 = vmatprep.subr.bf16.mxu0 0
    %340 = vmatpush2.bf16.msra.mxu0 0
    %341 = vmatprep.mubr.bf16.mxu0 0
    %342 = vmatmul.mubr.bf16.gmra.mxu0 %v60
    %v343 = vpop.f32.mrf.mxu0
    %v344 = vadd.f32 %v259, %v343
    %v345 = vpop.f32.mrf.mxu0
    %v346 = vpop.f32.mrf.mxu0
    %v347 = vadd.f32 %v259, %v346
    %v348 = vpop.f32.mrf.mxu0
    %349 = vmatprep.mubr.bf16.mxu0 0
    %350 = vmatmul.mubr.bf16.gmra.mxu0 %v61
    %v351 = vpop.f32.mrf.mxu0
    %v352 = vadd.f32 %v259, %v351
    %v353 = vpop.f32.mrf.mxu0
    %v354 = vpop.f32.mrf.mxu0
    %v355 = vadd.f32 %v259, %v354
    %v356 = vpop.f32.mrf.mxu0
    %357 = vmatprep.mubr.bf16.mxu0 0
    %358 = vmatmul.mubr.bf16.gmra.mxu0 %v62
    %v359 = vpop.f32.mrf.mxu0
    %v360 = vadd.f32 %v259, %v359
    %v361 = vpop.f32.mrf.mxu0
    %v362 = vpop.f32.mrf.mxu0
    %v363 = vadd.f32 %v259, %v362
    %v364 = vpop.f32.mrf.mxu0
    %365 = vmatprep.mubr.bf16.mxu0 0
    %366 = vmatmul.mubr.bf16.gmra.mxu0 %v63
    %v367 = vpop.f32.mrf.mxu0
    %v368 = vadd.f32 %v259, %v367
    %v369 = vpop.f32.mrf.mxu0
    %v370 = vpop.f32.mrf.mxu0
    %v371 = vadd.f32 %v259, %v370
    %v372 = vpop.f32.mrf.mxu0
    %373 = vmatprep.mubr.bf16.mxu0 0
    %374 = vmatmul.mubr.bf16.gmra.mxu0 %v64
    %v375 = vpop.f32.mrf.mxu0
    %v376 = vadd.f32 %v259, %v375
    %v377 = vpop.f32.mrf.mxu0
    %v378 = vpop.f32.mrf.mxu0
    %v379 = vadd.f32 %v259, %v378
    %v380 = vpop.f32.mrf.mxu0
    %381 = vmatprep.mubr.bf16.mxu0 0
    %382 = vmatmul.mubr.bf16.gmra.mxu0 %v65
    %v383 = vpop.f32.mrf.mxu0
    %v384 = vadd.f32 %v259, %v383
    %v385 = vpop.f32.mrf.mxu0
    %v386 = vpop.f32.mrf.mxu0
    %v387 = vadd.f32 %v259, %v386
    %v388 = vpop.f32.mrf.mxu0
    %389 = vmatprep.mubr.bf16.mxu0 0
    %390 = vmatmul.mubr.bf16.gmra.mxu0 %v66
    %v391 = vpop.f32.mrf.mxu0
    %v392 = vadd.f32 %v259, %v391
    %v393 = vpop.f32.mrf.mxu0
    %v394 = vpop.f32.mrf.mxu0
    %v395 = vadd.f32 %v259, %v394
    %v396 = vpop.f32.mrf.mxu0
    %397 = vmatprep.mubr.bf16.mxu0 0
    %398 = vmatmul.mubr.bf16.gmra.mxu0 %v67
    %v399 = vpop.f32.mrf.mxu0
    %v400 = vadd.f32 %v259, %v399
    %v401 = vpop.f32.mrf.mxu0
    %v402 = vpop.f32.mrf.mxu0
    %v403 = vadd.f32 %v259, %v402
    %v404 = vpop.f32.mrf.mxu0
    %405 = vdwg.mxu0
    %v406 = vmul.f32 %v344, 0.5
    %v407 = vmul.f32 %v347, 0.5
    %v408 = vmul.f32 %v352, 0.5
    %v409 = vmul.f32 %v355, 0.5
    %v410 = vmul.f32 %v360, 0.5
    %v411 = vmul.f32 %v363, 0.5
    %v412 = vmul.f32 %v368, 0.5
    %v413 = vmul.f32 %v371, 0.5
    %v414 = vmul.f32 %v376, 0.5
    %v415 = vmul.f32 %v379, 0.5
    %v416 = vmul.f32 %v384, 0.5
    %v417 = vmul.f32 %v387, 0.5
    %v418 = vmul.f32 %v392, 0.5
    %v419 = vmul.f32 %v395, 0.5
    %v420 = vmul.f32 %v400, 0.5
    %v421 = vmul.f32 %v403, 0.5
    %v422 = vmul.f32 %v344, %v344
    %v423 = vmul.f32 %v347, %v347
    %v424 = vmul.f32 %v352, %v352
    %v425 = vmul.f32 %v355, %v355
    %v426 = vmul.f32 %v360, %v360
    %v427 = vmul.f32 %v363, %v363
    %v428 = vmul.f32 %v368, %v368
    %v429 = vmul.f32 %v371, %v371
    %v430 = vmul.f32 %v376, %v376
    %v431 = vmul.f32 %v379, %v379
    %v432 = vmul.f32 %v384, %v384
    %v433 = vmul.f32 %v387, %v387
    %v434 = vmul.f32 %v392, %v392
    %v435 = vmul.f32 %v395, %v395
    %v436 = vmul.f32 %v400, %v400
    %v437 = vmul.f32 %v403, %v403
    %v438 = vmul.f32 %v422, %v344
    %v439 = vmul.f32 %v423, %v347
    %v440 = vmul.f32 %v424, %v352
    %v441 = vmul.f32 %v425, %v355
    %v442 = vmul.f32 %v426, %v360
    %v443 = vmul.f32 %v427, %v363
    %v444 = vmul.f32 %v428, %v368
    %v445 = vmul.f32 %v429, %v371
    %v446 = vmul.f32 %v430, %v376
    %v447 = vmul.f32 %v431, %v379
    %v448 = vmul.f32 %v432, %v384
    %v449 = vmul.f32 %v433, %v387
    %v450 = vmul.f32 %v434, %v392
    %v451 = vmul.f32 %v435, %v395
    %v452 = vmul.f32 %v436, %v400
    %v453 = vmul.f32 %v437, %v403
    %v454 = vmul.f32 %v438, 0.044715
    %v455 = vmul.f32 %v439, 0.044715
    %v456 = vmul.f32 %v440, 0.044715
    %v457 = vmul.f32 %v441, 0.044715
    %v458 = vmul.f32 %v442, 0.044715
    %v459 = vmul.f32 %v443, 0.044715
    %v460 = vmul.f32 %v444, 0.044715
    %v461 = vmul.f32 %v445, 0.044715
    %v462 = vmul.f32 %v446, 0.044715
    %v463 = vmul.f32 %v447, 0.044715
    %v464 = vmul.f32 %v448, 0.044715
    %v465 = vmul.f32 %v449, 0.044715
    %v466 = vmul.f32 %v450, 0.044715
    %v467 = vmul.f32 %v451, 0.044715
    %v468 = vmul.f32 %v452, 0.044715
    %v469 = vmul.f32 %v453, 0.044715
    %v470 = vadd.f32 %v344, %v454
    %v471 = vadd.f32 %v347, %v455
    %v472 = vadd.f32 %v352, %v456
    %v473 = vadd.f32 %v355, %v457
    %v474 = vadd.f32 %v360, %v458
    %v475 = vadd.f32 %v363, %v459
    %v476 = vadd.f32 %v368, %v460
    %v477 = vadd.f32 %v371, %v461
    %v478 = vadd.f32 %v376, %v462
    %v479 = vadd.f32 %v379, %v463
    %v480 = vadd.f32 %v384, %v464
    %v481 = vadd.f32 %v387, %v465
    %v482 = vadd.f32 %v392, %v466
    %v483 = vadd.f32 %v395, %v467
    %v484 = vadd.f32 %v400, %v468
    %v485 = vadd.f32 %v403, %v469
    %v486 = vmul.f32 %v470, 0.7978846
    %v487 = vmul.f32 %v471, 0.7978846
    %v488 = vmul.f32 %v472, 0.7978846
    %v489 = vmul.f32 %v473, 0.7978846
    %v490 = vmul.f32 %v474, 0.7978846
    %v491 = vmul.f32 %v475, 0.7978846
    %v492 = vmul.f32 %v476, 0.7978846
    %v493 = vmul.f32 %v477, 0.7978846
    %v494 = vmul.f32 %v478, 0.7978846
    %v495 = vmul.f32 %v479, 0.7978846
    %v496 = vmul.f32 %v480, 0.7978846
    %v497 = vmul.f32 %v481, 0.7978846
    %v498 = vmul.f32 %v482, 0.7978846
    %v499 = vmul.f32 %v483, 0.7978846
    %v500 = vmul.f32 %v484, 0.7978846
    %v501 = vmul.f32 %v485, 0.7978846
    %v502 = vtanh.pop %v486
    %v503 = vtanh.pop %v487
    %v504 = vtanh.pop %v488
    %v505 = vtanh.pop %v489
    %v506 = vtanh.pop %v490
    %v507 = vtanh.pop %v491
    %v508 = vtanh.pop %v492
    %v509 = vtanh.pop %v493
    %v510 = vtanh.pop %v494
    %v511 = vtanh.pop %v495
    %v512 = vtanh.pop %v496
    %v513 = vtanh.pop %v497
    %v514 = vtanh.pop %v498
    %v515 = vtanh.pop %v499
    %v516 = vtanh.pop %v500
    %v517 = vtanh.pop %v501
    %v518 = vadd.f32 %v502, 1.0
    %v519 = vadd.f32 %v503, 1.0
    %v520 = vadd.f32 %v504, 1.0
    %v521 = vadd.f32 %v505, 1.0
    %v522 = vadd.f32 %v506, 1.0
    %v523 = vadd.f32 %v507, 1.0
    %v524 = vadd.f32 %v508, 1.0
    %v525 = vadd.f32 %v509, 1.0
    %v526 = vadd.f32 %v510, 1.0
    %v527 = vadd.f32 %v511, 1.0
    %v528 = vadd.f32 %v512, 1.0
    %v529 = vadd.f32 %v513, 1.0
    %v530 = vadd.f32 %v514, 1.0
    %v531 = vadd.f32 %v515, 1.0
    %v532 = vadd.f32 %v516, 1.0
    %v533 = vadd.f32 %v517, 1.0
    %v534 = vmul.f32 %v406, %v518
    %v535 = vmul.f32 %v407, %v519
    %v536 = vmul.f32 %v408, %v520
    %v537 = vmul.f32 %v409, %v521
    %v538 = vmul.f32 %v410, %v522
    %v539 = vmul.f32 %v411, %v523
    %v540 = vmul.f32 %v412, %v524
    %v541 = vmul.f32 %v413, %v525
    %v542 = vmul.f32 %v414, %v526
    %v543 = vmul.f32 %v415, %v527
    %v544 = vmul.f32 %v416, %v528
    %v545 = vmul.f32 %v417, %v529
    %v546 = vmul.f32 %v418, %v530
    %v547 = vmul.f32 %v419, %v531
    %v548 = vmul.f32 %v420, %v532
    %v549 = vmul.f32 %v421, %v533
    %v550 = vmul.f32 %v174, %v534
    %v551 = vmul.f32 %v177, %v535
    %v552 = vmul.f32 %v182, %v536
    %v553 = vmul.f32 %v185, %v537
    %v554 = vmul.f32 %v190, %v538
    %v555 = vmul.f32 %v193, %v539
    %v556 = vmul.f32 %v198, %v540
    %v557 = vmul.f32 %v201, %v541
    %v558 = vmul.f32 %v206, %v542
    %v559 = vmul.f32 %v209, %v543
    %v560 = vmul.f32 %v214, %v544
    %v561 = vmul.f32 %v217, %v545
    %v562 = vmul.f32 %v222, %v546
    %v563 = vmul.f32 %v225, %v547
    %v564 = vmul.f32 %v230, %v548
    %v565 = vmul.f32 %v233, %v549
    %566 = vst [vmem:[#allocation7] sm:$0xff] %v550
    %567 = vst [vmem:[#allocation7 + $0x8] sm:$0xff] %v551
    %568 = vst [vmem:[#allocation7 + $0x10] sm:$0xff] %v552
    %569 = vst [vmem:[#allocation7 + $0x18] sm:$0xff] %v553
    %570 = vst [vmem:[#allocation7 + $0x20] sm:$0xff] %v554
    %571 = vst [vmem:[#allocation7 + $0x28] sm:$0xff] %v555
    %572 = vst [vmem:[#allocation7 + $0x30] sm:$0xff] %v556
    %573 = vst [vmem:[#allocation7 + $0x38] sm:$0xff] %v557
    %574 = vst [vmem:[#allocation7 + $0x40] sm:$0xff] %v558
    %575 = vst [vmem:[#allocation7 + $0x48] sm:$0xff] %v559
    %576 = vst [vmem:[#allocation7 + $0x50] sm:$0xff] %v560
    %577 = vst [vmem:[#allocation7 + $0x58] sm:$0xff] %v561
    %578 = vst [vmem:[#allocation7 + $0x60] sm:$0xff] %v562
    %579 = vst [vmem:[#allocation7 + $0x68] sm:$0xff] %v563
    %580 = vst [vmem:[#allocation7 + $0x70] sm:$0xff] %v564
    %581 = vst [vmem:[#allocation7 + $0x78] sm:$0xff] %v565
    // Predicated region
    $region22: #{apply.1} parent=1 // pred_check
      _
    $region23: #{apply.1} parent=1 // pred_check_branch
      %583 = sbr.rel (0) target = $region25
    $region24: #{apply.1} parent=1 // pred_region
      %s585 = ssub.s32 2048, 2048
      %586 = vsyncadd [#allocation4], %s585
      %s587 = sshll.u32 [#allocation7], 4
      %s588 = int_to_ptr.vmem [resolvable:$true] %s587
      %593 = dma.vmem_to_hbm [thread:$0]  %s588, 2048, %s3, [#allocation4], 128, 128, 8
    $region25: #{apply.1} parent=1 // pred_fallthru
      _
    // Predicated region
    $region26: #{apply.1} parent=1 // pred_check
      _
    $region27: #{apply.1} parent=1 // pred_check_branch
      %595 = sbr.rel (0) target = $region29
    $region28: #{apply.1} parent=1 // pred_region
      %596 = dma.done [#allocation4], 2048
    $region29: #{apply.1} parent=1 // pred_fallthru
      _
    %597 = vsyncpa [#allocation3], 1
    %598 = vsyncpa [#allocation6], 1
    %599 = vsyncpa [#allocation4], 1

</llo_original>
